<compile_context>
chip_gen: v6e
topology: v6e:2x2x1
jax: 0.10.0
libtpu: 0.0.40
codegen_flags: <defaults>
</compile_context>

<pallas_src>
import functools

import numpy as np
import jax
import jax.numpy as jnp
from jax import lax
from jax.experimental import pallas as pl
from jax.experimental.pallas import tpu as pltpu

EPSILON = float(np.finfo(np.float32).eps)
_LANE = 128
_SUBLANE = 8


def _round_up(x, m):
    return ((x + m - 1) // m) * m


def _ceil_div(a, b):
    return -(-a // b)


# ---------------------------------------------------------------------------
# Deterministic parameter construction (mirrors init_kernels in the module)
# ---------------------------------------------------------------------------
def _hamming_periodic(n):
    # scipy.signal.get_window('hamming', n, fftbins=True)
    return 0.54 - 0.46 * np.cos(2.0 * np.pi * np.arange(n) / n)


def init_kernels(win_len, win_inc, fft_len, win_type="hamming"):
    if win_type is None or win_type == "None":
        window = np.ones(win_len)
    elif win_type == "hamming":
        window = _hamming_periodic(win_len)
    else:
        raise ValueError(f"unsupported win_type {win_type}")
    N = fft_len
    fourier_basis = np.fft.rfft(np.eye(N))[:win_len]          # (win_len, N//2+1)
    real_kernel = np.real(fourier_basis)
    imag_kernel = np.imag(fourier_basis)
    kernel = np.concatenate([real_kernel, imag_kernel], 1).T  # (fft_len+2, win_len)
    kernel = kernel * window
    return kernel.astype(np.float32), window.astype(np.float32)


# ---------------------------------------------------------------------------
# Pallas kernels
# ---------------------------------------------------------------------------
def _stft_kernel(main_ref, halo_ref, w_ref, or_ref, oi_ref, *, R, half, half_pad):
    """One (signal-row, time-tile) grid step of the STFT conv1d.

    main_ref: (1, TT, hop)     hop-sized chunks of the padded signal (compute dtype)
    halo_ref: (1, 1, Hc, hop)  the R-1 chunks that follow this tile (Hc = max(R-1,1))
    w_ref:    (M, K)           combined real+imag analysis matrix, K = R*hop
    or_ref:   (1, half, TT)    real spectrum tile, (freq, time) layout, lane-dense
    oi_ref:   (1, half, TT)    imag spectrum tile
    """
    TT = main_ref.shape[1]
    x0 = main_ref[0]                                            # (TT, hop)
    if R > 1:
        slab = jnp.concatenate([x0, halo_ref[0, 0, :R - 1, :]], axis=0)  # (TT+R-1, hop)
        # im2col: xt[t, r*hop + j] = padded_signal[(t + r)*hop + j]
        xt = jnp.concatenate([slab[r:r + TT, :] for r in range(R)], axis=1)  # (TT, K)
    else:
        xt = x0
    # One big-K NT matmul (W @ xt^T): accumulation stays inside the MXU result
    # path instead of round-tripping an f32 accumulator through VMEM per r.
    res = lax.dot_general(w_ref[...], xt,
                          dimension_numbers=(((1,), (1,)), ((), ())),
                          preferred_element_type=jnp.float32)   # (M, TT)
    # real rows start at 0, imag rows start at half_pad (multiple of 8) -> both
    # slices are sublane-aligned; stores are lane-dense (TT % 128 == 0).
    or_ref[0] = res[:half, :].astype(or_ref.dtype)
    oi_ref[0] = res[half_pad:half_pad + half, :].astype(oi_ref.dtype)


def _vad_kernel(main_ref, halo_ref, w_ref, out_ref, *, R, threshold):
    """Frame mean over fft_len samples + threshold; (1, 8, TT) int32 lane-dense tile.

    Only row 0 of the 8-row sublane dimension carries data (rows 1..7 have zero
    weights); this keeps the output tile aligned instead of a 1-row store.
    """
    TT = main_ref.shape[1]
    x0 = main_ref[0]
    if R > 1:
        slab = jnp.concatenate([x0, halo_ref[0, 0, :R - 1, :]], axis=0)
        xt = jnp.concatenate([slab[r:r + TT, :] for r in range(R)], axis=1)
    else:
        xt = x0
    acc = lax.dot_general(w_ref[...], xt,
                          dimension_numbers=(((1,), (1,)), ((), ())),
                          preferred_element_type=jnp.float32)   # (8, TT)
    out_ref[0] = (acc >= threshold).astype(jnp.int32)


# ---------------------------------------------------------------------------
# ConvSTFT module
# ---------------------------------------------------------------------------
class ConvSTFT:
    def __init__(self, win_len, win_inc, fft_len=None, vad_threshold=2 / 3,
                 win_type="hamming", frames_per_tile=1024, vad_frames_per_tile=512,
                 compute_dtype=jnp.bfloat16, spec_dtype=jnp.float32):
        if fft_len is None:
            fft_len = int(2 ** np.ceil(np.log2(win_len)))
        self.fft_len = fft_len
        self.win_len = win_len
        self.stride = win_inc
        self.dim = fft_len
        self.vad_threshold = float(vad_threshold)
        # bf16 inputs/weights with f32 MXU accumulation (workload is HBM-bound);
        # pass compute_dtype=jnp.float32 to match the f32 conv1d bit-for-bit.
        self.compute_dtype = compute_dtype
        # f32 default preserves reference semantics; bf16 halves output HBM traffic.
        self.spec_dtype = spec_dtype
        self.frames_per_tile = max(_LANE, _round_up(int(frames_per_tile), _LANE))
        self.vad_frames_per_tile = max(_LANE, _round_up(int(vad_frames_per_tile), _LANE))

        kernel, _ = init_kernels(win_len, win_inc, fft_len, win_type)
        self.weight = jnp.asarray(kernel)              # (fft_len+2, win_len), f32 ref
        self.half = fft_len // 2 + 1
        self.half_pad = _round_up(self.half, _SUBLANE)

        # Combined analysis matrix: real rows [0, half), imag rows
        # [half_pad, half_pad + half); K zero-padded to R*hop chunks.
        hop = win_inc
        R = _ceil_div(win_len, hop)
        self.R = R
        K = R * hop
        M = self.half_pad + self.half
        w_all = np.zeros((M, K), np.float32)
        w_all[:self.half, :win_len] = kernel[:self.half]
        w_all[self.half_pad:self.half_pad + self.half, :win_len] = kernel[self.half:]
        self.w_all = jnp.asarray(w_all, dtype=compute_dtype)

        # VAD weights: row 0 = mean over fft_len samples, rows 1..7 zero.
        Rv = _ceil_div(fft_len, hop)
        self.Rv = Rv
        vw = np.zeros((8, Rv * hop), np.float32)
        vw[0, :fft_len] = 1.0 / fft_len
        self.vad_w = jnp.asarray(vw)

    # --- framing glue: chunked signal + tiny per-tile halo (no HBM slab/stack) ----
    def _prep(self, x2d, frame_len, tt_max, dtype):
        hop = self.stride
        pad = self.win_len - hop            # same F.pad as the PyTorch module (both convs)
        Bp, L = x2d.shape
        Lp = L + 2 * pad
        T = (Lp - frame_len) // hop + 1
        R = _ceil_div(frame_len, hop)
        TT = min(tt_max, _round_up(T, _LANE))
        nT = _ceil_div(T, TT)
        C_total = nT * TT + R - 1           # chunks any tile may touch
        total = C_total * hop
        base = L + pad
        if total >= base:
            xp = jnp.pad(x2d, ((0, 0), (pad, total - base)))
        else:
            xp = jnp.pad(x2d, ((0, 0), (pad, 0)))[:, :total]
        xp = xp.astype(dtype)
        main = xp.reshape(Bp, C_total, hop)  # free reshape; no HBM transpose/stack
        Hc = max(R - 1, 1)
        if R > 1:
            # halo for tile t = chunks [(t+1)*TT, (t+1)*TT + R - 1): tiny gather.
            idx = (jnp.arange(nT)[:, None] + 1) * TT + jnp.arange(R - 1)[None, :]
            halo = main[:, idx, :]           # (Bp, nT, R-1, hop)
        else:
            halo = jnp.zeros((Bp, nT, Hc, hop), dtype)
        return main, halo, T, nT, R, TT, Hc

    @staticmethod
    def _grid(Bp, nT):
        # Put the larger axis first so v7x's two TensorCores split the grid evenly.
        if nT > Bp:
            return (nT, Bp), (lambda g0, g1: g1), (lambda g0, g1: g0)
        return (Bp, nT), (lambda g0, g1: g0), (lambda g0, g1: g1)

    @staticmethod
    def _compiler_params(est_bytes):
        # ~2x the estimated footprint, never the whole physical VMEM of a v7x core.
        limit = int(min(48 << 20, max(16 << 20, 2 * est_bytes)))
        return pltpu.CompilerParams(
            dimension_semantics=("parallel", "parallel"),
            vmem_limit_bytes=limit,
        )

    def _stft_conv(self, x2d):
        """x2d (B', L) -> r, i each (B', half, T); equivalent to the padded conv1d."""
        Bp = x2d.shape[0]
        main, halo, T, nT, R, TT, Hc = self._prep(
            x2d, self.win_len, self.frames_per_tile, self.compute_dtype)
        hop, half, half_pad = self.stride, self.half, self.half_pad
        M, K = self.w_all.shape
        t_pad = nT * TT
        grid, b_of, t_of = self._grid(Bp, nT)
        itc = np.dtype(self.compute_dtype).itemsize
        ito = np.dtype(self.spec_dtype).itemsize
        est = (2 * TT * hop * itc + 2 * Hc * hop * itc + 2 * M * K * itc
               + 2 * 2 * half * TT * ito + TT * K * itc + M * TT * 4)
        out_sds = jax.ShapeDtypeStruct((Bp, half, t_pad), self.spec_dtype)
        r_full, i_full = pl.pallas_call(
            functools.partial(_stft_kernel, R=R, half=half, half_pad=half_pad),
            out_shape=(out_sds, out_sds),
            grid=grid,
            in_specs=[
                pl.BlockSpec((1, TT, hop),
                             lambda g0, g1: (b_of(g0, g1), t_of(g0, g1), 0)),
                pl.BlockSpec((1, 1, Hc, hop),
                             lambda g0, g1: (b_of(g0, g1), t_of(g0, g1), 0, 0)),
                pl.BlockSpec((M, K), lambda g0, g1: (0, 0)),   # resident weights
            ],
            out_specs=(
                pl.BlockSpec((1, half, TT),
                             lambda g0, g1: (b_of(g0, g1), 0, t_of(g0, g1))),
                pl.BlockSpec((1, half, TT),
                             lambda g0, g1: (b_of(g0, g1), 0, t_of(g0, g1))),
            ),
            compiler_params=self._compiler_params(est),
        )(main, halo, self.w_all)
        if t_pad != T:
            # TODO(synk): carry T as metadata / choose frames_per_tile so t_pad == T
            # and avoid this extra HBM pass over the spectrum for the tail tile.
            r_full = r_full[:, :, :T]
            i_full = i_full[:, :, :T]
        return r_full, i_full, T

    def _vad_conv(self, azi2d):
        """azi2d (B', L) -> (B', T_vad) int32 (frame mean >= threshold)."""
        Bp = azi2d.shape[0]
        main, halo, T, nT, R, TT, Hc = self._prep(
            azi2d, self.fft_len, self.vad_frames_per_tile, jnp.float32)
        hop = self.stride
        M, K = self.vad_w.shape
        t_pad = nT * TT
        grid, b_of, t_of = self._grid(Bp, nT)
        est = (2 * TT * hop * 4 + 2 * Hc * hop * 4 + 2 * M * K * 4
               + 2 * 8 * TT * 4 + TT * K * 4 + 8 * TT * 4)
        out = pl.pallas_call(
            functools.partial(_vad_kernel, R=R, threshold=self.vad_threshold),
            out_shape=jax.ShapeDtypeStruct((Bp, 8, t_pad), jnp.int32),
            grid=grid,
            in_specs=[
                pl.BlockSpec((1, TT, hop),
                             lambda g0, g1: (b_of(g0, g1), t_of(g0, g1), 0)),
                pl.BlockSpec((1, 1, Hc, hop),
                             lambda g0, g1: (b_of(g0, g1), t_of(g0, g1), 0, 0)),
                pl.BlockSpec((M, K), lambda g0, g1: (0, 0)),
            ],
            out_specs=pl.BlockSpec((1, 8, TT),
                                   lambda g0, g1: (b_of(g0, g1), 0, t_of(g0, g1))),
            compiler_params=self._compiler_params(est),
        )(main, halo, self.vad_w)
        return out[:, 0, :T], T

    def forward(self, inputs, azi, cplx=True):
        if inputs.ndim == 2:
            # (N, L) branch: azi is passed through untouched (as in the PyTorch code)
            r, i, _ = self._stft_conv(inputs)                # (N, half, T)
        else:
            N, C, L = inputs.shape
            r2, i2, T = self._stft_conv(inputs.reshape(N * C, L))
            r = r2.reshape(N, C, self.half, T)
            i = i2.reshape(N, C, self.half, T)
            Na, P, La = azi.shape
            vad, Tv = self._vad_conv(azi.reshape(Na * P, La))
            azi = vad.reshape(Na, P, Tv)

        if cplx:
            return r, i, azi
        # TODO(synk): atan2 stays in XLA (Mosaic lowering not guaranteed across jax
        # versions); XLA fuses the mags/phase epilogue into one pass over r, i.
        mags = jnp.clip(r ** 2 + i ** 2, EPSILON, None) ** 0.5
        phase = jnp.arctan2(i + EPSILON, r + EPSILON)   # EPSILON bias kept to match ref
        return mags, phase, azi

    __call__ = forward


# ---------------------------------------------------------------------------
# Reference helpers (numpy, for correctness checks)
# ---------------------------------------------------------------------------
def _frames_np(sig, frame_len, stride, pad):
    sp = np.pad(sig, ((0, 0), (pad, pad)))
    T = (sp.shape[1] - frame_len) // stride + 1
    idx = np.arange(T)[:, None] * stride + np.arange(frame_len)[None, :]
    return sp[:, idx], T


if __name__ == "__main__":
    key = jax.random.PRNGKey(0)
    k1, k2 = jax.random.split(key)

    N, C, L = 2, 4, 64
    P = 2
    win_len, win_inc, fft_len = 16, 8, 16

    stft = ConvSTFT(win_len, win_inc, fft_len, win_type="hamming")
    fwd = jax.jit(stft.forward, static_argnames=("cplx",))

    x = jax.random.normal(k1, (N, C, L), dtype=jnp.float32)
    azi = jax.random.uniform(k2, (N, P, L), dtype=jnp.float32)

    r, i, vad = fwd(x, azi, cplx=True)
    jax.block_until_ready((r, i, vad))

    # ---- numpy references ----------------------------------------------------
    pad = win_len - win_inc
    half = fft_len // 2 + 1
    w_np = np.asarray(stft.weight, np.float64)              # (fft_len+2, win_len)

    x_np = np.asarray(x, np.float64).reshape(N * C, L)
    fr, T = _frames_np(x_np, win_len, win_inc, pad)
    ref = np.einsum("btk,fk->bft", fr, w_np).reshape(N, C, fft_len + 2, T)

    # loose check vs. full-precision semantics (kernel uses bf16 inputs, f32 accum)
    assert np.allclose(np.asarray(r), ref[:, :, :half], rtol=1e-1, atol=1e-1)
    assert np.allclose(np.asarray(i), ref[:, :, half:], rtol=1e-1, atol=1e-1)

    # tight check vs. a bf16-quantized reference (validates framing / accumulation)
    xq = np.asarray(jnp.asarray(x, jnp.bfloat16).astype(jnp.float32),
                    np.float64).reshape(N * C, L)
    wq = np.asarray(jnp.asarray(stft.weight, jnp.bfloat16).astype(jnp.float32),
                    np.float64)
    frq, _ = _frames_np(xq, win_len, win_inc, pad)
    refq = np.einsum("btk,fk->bft", frq, wq).reshape(N, C, fft_len + 2, T)
    assert np.allclose(np.asarray(r), refq[:, :, :half], rtol=1e-3, atol=1e-3)
    assert np.allclose(np.asarray(i), refq[:, :, half:], rtol=1e-3, atol=1e-3)

    # VAD reference (compare only frames not sitting exactly at the threshold)
    a_np = np.asarray(azi, np.float64).reshape(N * P, L)
    frv, Tv = _frames_np(a_np, fft_len, win_inc, pad)
    means = frv.mean(-1)
    vad_ref = (means >= stft.vad_threshold).astype(np.int32).reshape(N, P, Tv)
    decisive = (np.abs(means - stft.vad_threshold) > 1e-5).reshape(N, P, Tv)
    assert np.array_equal(np.asarray(vad)[decisive], vad_ref[decisive])

    # 2-D input branch (azi passes through untouched)
    r2, i2, _azi_pass = fwd(x[:, 0, :], azi, cplx=True)
    jax.block_until_ready((r2, i2))
    assert np.allclose(np.asarray(r2), refq[:, 0, :half], rtol=1e-3, atol=1e-3)

    # cplx=False epilogue
    mags, phase, _ = fwd(x, azi, cplx=False)
    jax.block_until_ready((mags, phase))

    print("KERNEL_OK")
</pallas_src>

<mosaic_0001>
module attributes {stable_mosaic.version = 11 : i64} {
  func.func @_stft_kernel(%arg0: i32, %arg1: i32, %arg2: memref<1x128x8xbf16, #tpu.memory_space<vmem>>, %arg3: memref<1x1x1x8xbf16, #tpu.memory_space<vmem>>, %arg4: memref<25x16xbf16, #tpu.memory_space<vmem>>, %arg5: memref<1x9x128xf32, #tpu.memory_space<vmem>>, %arg6: memref<1x9x128xf32, #tpu.memory_space<vmem>>) attributes {dimension_semantics = [#tpu.dimension_semantics<parallel>, #tpu.dimension_semantics<parallel>], iteration_bounds = array<i64: 8, 1>, scalar_prefetch = 0 : i64, scratch_operands = 0 : i64, tpu.core_type = #tpu.core_type<tc>, window_params = [{transform_indices = @transform_0, window_bounds = array<i64: 1, 128, 8>}, {transform_indices = @transform_1, window_bounds = array<i64: 1, 1, 1, 8>}, {pipeline_mode = #tpu.pipeline_mode<synchronous>, transform_indices = @transform_2, window_bounds = array<i64: 25, 16>}, {transform_indices = @transform_3, window_bounds = array<i64: 1, 9, 128>}, {transform_indices = @transform_4, window_bounds = array<i64: 1, 9, 128>}]} {
    %c0 = arith.constant 0 : index
    %c0_0 = arith.constant 0 : index
    %c0_1 = arith.constant 0 : index
    %0 = vector.load %arg2[%c0, %c0_0, %c0_1] : memref<1x128x8xbf16, #tpu.memory_space<vmem>>, vector<1x128x8xbf16>
    %1 = vector.shape_cast %0 : vector<1x128x8xbf16> to vector<128x8xbf16>
    %c0_2 = arith.constant 0 : index
    %c0_3 = arith.constant 0 : index
    %c0_4 = arith.constant 0 : index
    %c0_5 = arith.constant 0 : index
    %2 = vector.load %arg3[%c0_2, %c0_3, %c0_4, %c0_5] : memref<1x1x1x8xbf16, #tpu.memory_space<vmem>>, vector<1x1x1x8xbf16>
    %3 = vector.shape_cast %2 : vector<1x1x1x8xbf16> to vector<1x8xbf16>
    %4 = tpu.concatenate %1, %3 in 0 : vector<128x8xbf16>, vector<1x8xbf16> -> vector<129x8xbf16>
    %5 = vector.extract_strided_slice %4 {offsets = [0, 0], sizes = [128, 8], strides = [1, 1]} : vector<129x8xbf16> to vector<128x8xbf16>
    %6 = vector.extract_strided_slice %4 {offsets = [1, 0], sizes = [128, 8], strides = [1, 1]} : vector<129x8xbf16> to vector<128x8xbf16>
    %7 = tpu.concatenate %5, %6 in 1 : vector<128x8xbf16>, vector<128x8xbf16> -> vector<128x16xbf16>
    %c0_6 = arith.constant 0 : index
    %c0_7 = arith.constant 0 : index
    %8 = vector.load %arg4[%c0_6, %c0_7] : memref<25x16xbf16, #tpu.memory_space<vmem>>, vector<25x16xbf16>
    %cst = arith.constant dense<0.000000e+00> : vector<25x128xf32>
    %9 = tpu.matmul %8, %7, %cst {dimension_numbers = #tpu.dot_dimension_numbers<[1], [1], [0], [0], [0, 0, 1, 0], [], []>} : vector<25x16xbf16>, vector<128x16xbf16>, vector<25x128xf32> -> vector<25x128xf32>
    %10 = vector.extract_strided_slice %9 {offsets = [0, 0], sizes = [9, 128], strides = [1, 1]} : vector<25x128xf32> to vector<9x128xf32>
    %c0_8 = arith.constant 0 : index
    %c0_9 = arith.constant 0 : index
    %c0_10 = arith.constant 0 : index
    %11 = vector.load %arg5[%c0_8, %c0_9, %c0_10] : memref<1x9x128xf32, #tpu.memory_space<vmem>>, vector<1x9x128xf32>
    %12 = vector.shape_cast %11 : vector<1x9x128xf32> to vector<9x128xf32>
    %13 = vector.shape_cast %10 : vector<9x128xf32> to vector<1x9x128xf32>
    tpu.vector_store %arg5[%c0_8, %c0_9, %c0_10], %13 {strides = array<i32>} : memref<1x9x128xf32, #tpu.memory_space<vmem>>, vector<1x9x128xf32>,
    %14 = vector.extract_strided_slice %9 {offsets = [16, 0], sizes = [9, 128], strides = [1, 1]} : vector<25x128xf32> to vector<9x128xf32>
    %c0_11 = arith.constant 0 : index
    %c0_12 = arith.constant 0 : index
    %c0_13 = arith.constant 0 : index
    %15 = vector.load %arg6[%c0_11, %c0_12, %c0_13] : memref<1x9x128xf32, #tpu.memory_space<vmem>>, vector<1x9x128xf32>
    %16 = vector.shape_cast %15 : vector<1x9x128xf32> to vector<9x128xf32>
    %17 = vector.shape_cast %14 : vector<9x128xf32> to vector<1x9x128xf32>
    tpu.vector_store %arg6[%c0_11, %c0_12, %c0_13], %17 {strides = array<i32>} : memref<1x9x128xf32, #tpu.memory_space<vmem>>, vector<1x9x128xf32>,
    return
  }
  func.func @transform_0(%arg0: i32, %arg1: i32) -> (i32, i32, i32) {
    %c0_i32 = arith.constant 0 : i32
    %c0_i32_0 = arith.constant 0 : i32
    return %arg0, %arg1, %c0_i32 : i32, i32, i32
  }
  func.func @transform_1(%arg0: i32, %arg1: i32) -> (i32, i32, i32, i32) {
    %c0_i32 = arith.constant 0 : i32
    %c0_i32_0 = arith.constant 0 : i32
    %c0_i32_1 = arith.constant 0 : i32
    return %arg0, %arg1, %c0_i32, %c0_i32_0 : i32, i32, i32, i32
  }
  func.func @transform_2(%arg0: i32, %arg1: i32) -> (i32, i32) {
    %c0_i32 = arith.constant 0 : i32
    %c0_i32_0 = arith.constant 0 : i32
    %c0_i32_1 = arith.constant 0 : i32
    return %c0_i32, %c0_i32_0 : i32, i32
  }
  func.func @transform_3(%arg0: i32, %arg1: i32) -> (i32, i32, i32) {
    %c0_i32 = arith.constant 0 : i32
    %c0_i32_0 = arith.constant 0 : i32
    return %arg0, %c0_i32, %arg1 : i32, i32, i32
  }
  func.func @transform_4(%arg0: i32, %arg1: i32) -> (i32, i32, i32) {
    %c0_i32 = arith.constant 0 : i32
    %c0_i32_0 = arith.constant 0 : i32
    return %arg0, %c0_i32, %arg1 : i32, i32, i32
  }
}

module attributes {stable_mosaic.version = 11 : i64} {
  func.func @_vad_kernel(%arg0: i32, %arg1: i32, %arg2: memref<1x128x8xf32, #tpu.memory_space<vmem>>, %arg3: memref<1x1x1x8xf32, #tpu.memory_space<vmem>>, %arg4: memref<8x16xf32, #tpu.memory_space<vmem>>, %arg5: memref<1x8x128xi32, #tpu.memory_space<vmem>>) attributes {dimension_semantics = [#tpu.dimension_semantics<parallel>, #tpu.dimension_semantics<parallel>], iteration_bounds = array<i64: 4, 1>, scalar_prefetch = 0 : i64, scratch_operands = 0 : i64, tpu.core_type = #tpu.core_type<tc>, window_params = [{transform_indices = @transform_0, window_bounds = array<i64: 1, 128, 8>}, {transform_indices = @transform_1, window_bounds = array<i64: 1, 1, 1, 8>}, {pipeline_mode = #tpu.pipeline_mode<synchronous>, transform_indices = @transform_2, window_bounds = array<i64: 8, 16>}, {transform_indices = @transform_3, window_bounds = array<i64: 1, 8, 128>}]} {
    %c0 = arith.constant 0 : index
    %c0_0 = arith.constant 0 : index
    %c0_1 = arith.constant 0 : index
    %0 = vector.load %arg2[%c0, %c0_0, %c0_1] : memref<1x128x8xf32, #tpu.memory_space<vmem>>, vector<1x128x8xf32>
    %1 = vector.shape_cast %0 : vector<1x128x8xf32> to vector<128x8xf32>
    %c0_2 = arith.constant 0 : index
    %c0_3 = arith.constant 0 : index
    %c0_4 = arith.constant 0 : index
    %c0_5 = arith.constant 0 : index
    %2 = vector.load %arg3[%c0_2, %c0_3, %c0_4, %c0_5] : memref<1x1x1x8xf32, #tpu.memory_space<vmem>>, vector<1x1x1x8xf32>
    %3 = vector.shape_cast %2 : vector<1x1x1x8xf32> to vector<1x8xf32>
    %4 = tpu.concatenate %1, %3 in 0 : vector<128x8xf32>, vector<1x8xf32> -> vector<129x8xf32>
    %5 = vector.extract_strided_slice %4 {offsets = [0, 0], sizes = [128, 8], strides = [1, 1]} : vector<129x8xf32> to vector<128x8xf32>
    %6 = vector.extract_strided_slice %4 {offsets = [1, 0], sizes = [128, 8], strides = [1, 1]} : vector<129x8xf32> to vector<128x8xf32>
    %7 = tpu.concatenate %5, %6 in 1 : vector<128x8xf32>, vector<128x8xf32> -> vector<128x16xf32>
    %c0_6 = arith.constant 0 : index
    %c0_7 = arith.constant 0 : index
    %8 = vector.load %arg4[%c0_6, %c0_7] : memref<8x16xf32, #tpu.memory_space<vmem>>, vector<8x16xf32>
    %cst = arith.constant dense<0.000000e+00> : vector<8x128xf32>
    %9 = tpu.matmul %8, %7, %cst {dimension_numbers = #tpu.dot_dimension_numbers<[1], [1], [0], [0], [0, 0, 1, 0], [], []>} : vector<8x16xf32>, vector<128x16xf32>, vector<8x128xf32> -> vector<8x128xf32>
    %cst_8 = arith.constant 0.666666686 : f32
    %10 = vector.broadcast %cst_8 : f32 to vector<8x128xf32>
    %11 = arith.cmpf oge, %9, %10 : vector<8x128xf32>
    %12 = arith.extui %11 : vector<8x128xi1> to vector<8x128xi32>
    %c0_9 = arith.constant 0 : index
    %c0_10 = arith.constant 0 : index
    %c0_11 = arith.constant 0 : index
    %13 = vector.load %arg5[%c0_9, %c0_10, %c0_11] : memref<1x8x128xi32, #tpu.memory_space<vmem>>, vector<1x8x128xi32>
    %14 = vector.shape_cast %13 : vector<1x8x128xi32> to vector<8x128xi32>
    %15 = vector.shape_cast %12 : vector<8x128xi32> to vector<1x8x128xi32>
    tpu.vector_store %arg5[%c0_9, %c0_10, %c0_11], %15 {strides = array<i32>} : memref<1x8x128xi32, #tpu.memory_space<vmem>>, vector<1x8x128xi32>,
    return
  }
  func.func @transform_0(%arg0: i32, %arg1: i32) -> (i32, i32, i32) {
    %c0_i32 = arith.constant 0 : i32
    %c0_i32_0 = arith.constant 0 : i32
    return %arg0, %arg1, %c0_i32 : i32, i32, i32
  }
  func.func @transform_1(%arg0: i32, %arg1: i32) -> (i32, i32, i32, i32) {
    %c0_i32 = arith.constant 0 : i32
    %c0_i32_0 = arith.constant 0 : i32
    %c0_i32_1 = arith.constant 0 : i32
    return %arg0, %arg1, %c0_i32, %c0_i32_0 : i32, i32, i32, i32
  }
  func.func @transform_2(%arg0: i32, %arg1: i32) -> (i32, i32) {
    %c0_i32 = arith.constant 0 : i32
    %c0_i32_0 = arith.constant 0 : i32
    %c0_i32_1 = arith.constant 0 : i32
    return %c0_i32, %c0_i32_0 : i32, i32
  }
  func.func @transform_3(%arg0: i32, %arg1: i32) -> (i32, i32, i32) {
    %c0_i32 = arith.constant 0 : i32
    %c0_i32_0 = arith.constant 0 : i32
    return %arg0, %c0_i32, %arg1 : i32, i32, i32
  }
}

</mosaic_0001>

<llo_original>
// kernel: forward.2
$region0: #{forward.2}
  #allocation0 [shape = 'u32[]', space=smem, size = 0x4, offset = 0x4, fixed_abs, tag = 'smem constant byte address 0x4 - core index']
  #allocation1 [shape = 'u32[144,128]{1,0:T(1,128)}', space=vmem, size = 0x12000, scoped, tag = 'internal scratch']
  %s0 = inlined_call_operand.vmem [shape: bf16[8,129,8], index: 0, kind: input, shape index: {}]
  %s1 = inlined_call_operand.vmem [shape: bf16[8,1,1,8], index: 1, kind: input, shape index: {}]
  %s2 = inlined_call_operand.vmem [shape: bf16[25,16], index: 2, kind: input, shape index: {}]
  %s3 = inlined_call_operand.vmem [shape: f32[8,9,128], index: 3, kind: output, shape index: {0}]
  %s4 = inlined_call_operand.vmem [shape: f32[8,9,128], index: 4, kind: output, shape index: {1}]
  %5 = xla_tuple %s3, %s4
  %s6 = sld [smem:[#allocation0]]
  $region53: #{forward.2} parent=0
    _
  %s8 = ssub.s32 1, %s6
  %s9 = scalar_select 0, %s8, %s6
  loop: start=0, step=1, limit=10
  $region2: #{forward.2} parent=0 // loop_pre_header
    _
  $region3: #{forward.2} parent=0 // loop_header
    %s11 = sphi 0, %s15
    %p12 = scmp.ge.s32.totalorder %s11, 10
    %s18 = sphi 0, %s30
    %s19 = sphi 0, %s26
    %s20 = sphi 0, %s18
    %s21 = sphi 0, %s19
    %s22 = sphi 0, %s20
    %s23 = sphi 0, %s21
    %s35 = sphi 0, %s37
    %s38 = sphi 0, %s35
    %s39 = sphi 0, %s38
    %s55 = sphi 0, %s39
    %s63 = sphi 0, %s65
    %s66 = sphi 0, %s63
    %s67 = sphi 0, %s66
    %s83 = sphi 0, %s67
    %s87 = sphi 0, %s87
    %s89 = sphi 0, %s87
    %s90 = sphi 0, %s89
    %s104 = sphi 0, %s90
    %s112 = sphi 0, %s114
    %s115 = sphi 0, %s112
    %s116 = sphi 0, %s115
    %s132 = sphi 0, %s116
    %s140 = sphi 0, %s142
    %s143 = sphi 0, %s140
    %s144 = sphi 0, %s143
    %s160 = sphi 0, %s144
  $region4: #{forward.2} parent=0 // loop_header_branch
    %14 = sbr.rel (%p12) target = $region8
  $region5: #{forward.2} parent=0 // loop_body
    %s16 = ssub.s32 %s11, 1
    %s17 = ssub.s32 %s11, 2
    %s24 = sadd.s32 1, %s19
    %p25 = scmp.ge.s32.totalorder %s24, 1
    %s26 = scalar_select %p25, 0, %s24
    %s27 = sadd.s32 1, %s18
    %s28 = scalar_select %p25, %s27, %s18
    %p29 = scmp.ge.s32.totalorder %s28, 8
    %s30 = scalar_select %p29, 0, %s28
    %s31 = ssub.s32 %s18, %s30
    %s32 = ssub.s32 %s19, %s26
    %s33 = sor.u32 %s31, %s32
    %p34 = scmp.eq.s32.totalorder %s33, 0
    %s36 = sadd.s32 %s35, 1
    %s37 = scalar_select %p34, %s35, %s36
    %p40 = pneg %p34
    %p41 = scmp.eq.s32.totalorder %s11, 7
    %p42 = por %p40, %p41
    %p43 = scmp.ne.s32.totalorder %s35, %s38
    %p44 = scmp.eq.s32.totalorder %s11, 0
    %p45 = por %p43, %p44
    %p46 = scmp.ne.s32.totalorder %s35, %s38
    %p47 = scmp.eq.s32.totalorder %s16, 7
    %p48 = por %p46, %p47
    %p49 = scmp.ne.s32.totalorder %s38, %s39
    %p50 = scmp.eq.s32.totalorder %s16, 0
    %p51 = por %p49, %p50
    %p52 = scmp.ne.s32.totalorder %s38, %s39
    %p53 = scmp.eq.s32.totalorder %s17, 7
    %p54 = por %p52, %p53
    %p56 = scmp.ne.s32.totalorder %s39, %s55
    %p57 = scmp.eq.s32.totalorder %s17, 0
    %p58 = por %p56, %p57
    %s59 = ssub.s32 %s18, %s30
    %s60 = ssub.s32 %s19, %s26
    %s61 = sor.u32 %s59, %s60
    %p62 = scmp.eq.s32.totalorder %s61, 0
    %s64 = sadd.s32 %s63, 1
    %s65 = scalar_select %p62, %s63, %s64
    %p68 = pneg %p62
    %p69 = scmp.eq.s32.totalorder %s11, 7
    %p70 = por %p68, %p69
    %p71 = scmp.ne.s32.totalorder %s63, %s66
    %p72 = scmp.eq.s32.totalorder %s11, 0
    %p73 = por %p71, %p72
    %p74 = scmp.ne.s32.totalorder %s63, %s66
    %p75 = scmp.eq.s32.totalorder %s16, 7
    %p76 = por %p74, %p75
    %p77 = scmp.ne.s32.totalorder %s66, %s67
    %p78 = scmp.eq.s32.totalorder %s16, 0
    %p79 = por %p77, %p78
    %p80 = scmp.ne.s32.totalorder %s66, %s67
    %p81 = scmp.eq.s32.totalorder %s17, 7
    %p82 = por %p80, %p81
    %p84 = scmp.ne.s32.totalorder %s67, %s83
    %p85 = scmp.eq.s32.totalorder %s17, 0
    %p86 = por %p84, %p85
    %s88 = sadd.s32 %s87, 1
    %p91 = scmp.eq.s32.totalorder %s11, 7
    %p92 = scmp.ne.s32.totalorder %s87, %s89
    %p93 = scmp.eq.s32.totalorder %s11, 0
    %p94 = por %p92, %p93
    %p95 = scmp.ne.s32.totalorder %s87, %s89
    %p96 = scmp.eq.s32.totalorder %s16, 7
    %p97 = por %p95, %p96
    %p98 = scmp.ne.s32.totalorder %s89, %s90
    %p99 = scmp.eq.s32.totalorder %s16, 0
    %p100 = por %p98, %p99
    %p101 = scmp.ne.s32.totalorder %s89, %s90
    %p102 = scmp.eq.s32.totalorder %s17, 7
    %p103 = por %p101, %p102
    %p105 = scmp.ne.s32.totalorder %s90, %s104
    %p106 = scmp.eq.s32.totalorder %s17, 0
    %p107 = por %p105, %p106
    %s108 = ssub.s32 %s18, %s30
    %s109 = ssub.s32 %s19, %s26
    %s110 = sor.u32 %s108, %s109
    %p111 = scmp.eq.s32.totalorder %s110, 0
    %s113 = sadd.s32 %s112, 1
    %s114 = scalar_select %p111, %s112, %s113
    %p117 = pneg %p111
    %p118 = scmp.eq.s32.totalorder %s11, 7
    %p119 = por %p117, %p118
    %p120 = scmp.ne.s32.totalorder %s112, %s115
    %p121 = scmp.eq.s32.totalorder %s11, 0
    %p122 = por %p120, %p121
    %p123 = scmp.ne.s32.totalorder %s112, %s115
    %p124 = scmp.eq.s32.totalorder %s16, 7
    %p125 = por %p123, %p124
    %p126 = scmp.ne.s32.totalorder %s115, %s116
    %p127 = scmp.eq.s32.totalorder %s16, 0
    %p128 = por %p126, %p127
    %p129 = scmp.ne.s32.totalorder %s115, %s116
    %p130 = scmp.eq.s32.totalorder %s17, 7
    %p131 = por %p129, %p130
    %p133 = scmp.ne.s32.totalorder %s116, %s132
    %p134 = scmp.eq.s32.totalorder %s17, 0
    %p135 = por %p133, %p134
    %s136 = ssub.s32 %s18, %s30
    %s137 = ssub.s32 %s19, %s26
    %s138 = sor.u32 %s136, %s137
    %p139 = scmp.eq.s32.totalorder %s138, 0
    %s141 = sadd.s32 %s140, 1
    %s142 = scalar_select %p139, %s140, %s141
    %p145 = pneg %p139
    %p146 = scmp.eq.s32.totalorder %s11, 7
    %p147 = por %p145, %p146
    %p148 = scmp.ne.s32.totalorder %s140, %s143
    %p149 = scmp.eq.s32.totalorder %s11, 0
    %p150 = por %p148, %p149
    %p151 = scmp.ne.s32.totalorder %s140, %s143
    %p152 = scmp.eq.s32.totalorder %s16, 7
    %p153 = por %p151, %p152
    %p154 = scmp.ne.s32.totalorder %s143, %s144
    %p155 = scmp.eq.s32.totalorder %s16, 0
    %p156 = por %p154, %p155
    %p157 = scmp.ne.s32.totalorder %s143, %s144
    %p158 = scmp.eq.s32.totalorder %s17, 7
    %p159 = por %p157, %p158
    %p161 = scmp.ne.s32.totalorder %s144, %s160
    %p162 = scmp.eq.s32.totalorder %s17, 0
    %p163 = por %p161, %p162
    %p164 = scmp.le.s32.totalorder 1, %s11
    %p165 = scmp.lt.s32.totalorder %s11, 9
    %p166 = pnand %p164, %p165
    %p167 = pneg %p166
    // Predicated region
    $region9: #{forward.2} parent=5 // pred_check
      _
    $region10: #{forward.2} parent=5 // pred_check_branch
      %169 = sbr.rel (%p166) target = $region12
    $region11: #{forward.2} parent=5 // pred_region
      %s170 = ssub.s32 %s11, 1
      // Predicated region
      $region13: #{forward.2} parent=11 // pred_check
        %p171 = pneg %p100
      $region14: #{forward.2} parent=11 // pred_check_branch
        %173 = sbr.rel (%p171) target = $region16
      $region15: #{forward.2} parent=11 // pred_region
        _
      $region16: #{forward.2} parent=11 // pred_fallthru
        _
    $region12: #{forward.2} parent=5 // pred_fallthru
      _
    %p174 = scmp.lt.s32.totalorder %s11, 8
    // Predicated region
    $region17: #{forward.2} parent=5 // pred_check
      %p175 = pneg %p174
    $region18: #{forward.2} parent=5 // pred_check_branch
      %177 = sbr.rel (%p175) target = $region20
    $region19: #{forward.2} parent=5 // pred_region
      // Predicated region
      $region21: #{forward.2} parent=19 // pred_check
        %p178 = pneg %p45
      $region22: #{forward.2} parent=19 // pred_check_branch
        %180 = sbr.rel (%p178) target = $region24
      $region23: #{forward.2} parent=19 // pred_region
        %s181 = smul.u32 16, %s19
        %s182 = ssub.s32 17, %s181
        %p183 = scmp.lt.s32.totalorder %s182, 16
        %s184 = scalar_select %p183, %s182, 16
        %s185 = smul.u32 64, %s184
        %p186 = scmp.lt.s32.totalorder %s18, 7
        %s187 = scalar_select %p186, %s18, 7
        %p188 = scmp.lt.s32.totalorder %s181, 16
        %s189 = scalar_select %p188, %s181, 16
        %s190 = smul.addr %s187, 17
        %s191 = sadd.s32 %s189, %s190
        %s192 = smul.addr %s191, 4
        %s193 = scalar_lea.vmem %s0, %s192
        %s194 = smul.u32 16, %s19
        %s195 = ssub.s32 17, %s194
        %p196 = scmp.lt.s32.totalorder %s195, 16
        %s197 = scalar_select %p196, %s195, 16
        %s198 = smul.u32 64, %s197
      $region24: #{forward.2} parent=19 // pred_fallthru
        _
      // Predicated region
      $region25: #{forward.2} parent=19 // pred_check
        %p199 = pneg %p73
      $region26: #{forward.2} parent=19 // pred_check_branch
        %201 = sbr.rel (%p199) target = $region28
      $region27: #{forward.2} parent=19 // pred_region
        %p202 = scmp.lt.s32.totalorder %s18, 7
        %s203 = scalar_select %p202, %s18, 7
        %p204 = scmp.lt.s32.totalorder %s19, 0
        %s205 = scalar_select %p204, %s19, 0
        %s206 = sadd.s32 %s205, %s203
        %s207 = scalar_lea.vmem %s1, %s206
      $region28: #{forward.2} parent=19 // pred_fallthru
        _
    $region20: #{forward.2} parent=5 // pred_fallthru
      _
    %p208 = scmp.le.s32.totalorder 1, %s11
    %p209 = scmp.lt.s32.totalorder %s11, 9
    %p210 = pnand %p208, %p209
    %p211 = pneg %p210
    // Predicated region
    $region29: #{forward.2} parent=5 // pred_check
      _
    $region30: #{forward.2} parent=5 // pred_check_branch
      %213 = sbr.rel (%p210) target = $region32
    $region31: #{forward.2} parent=5 // pred_region
      %s214 = ssub.s32 %s11, 1
      %s215 = smul.u32 16, %s21
      %s216 = ssub.s32 17, %s215
      %p217 = scmp.lt.s32.totalorder %s216, 16
      %s218 = scalar_select %p217, %s216, 16
      %s219 = smul.u32 64, %s218
      %p220 = scmp.lt.s32.totalorder %s20, 7
      %s221 = scalar_select %p220, %s20, 7
      %p222 = scmp.lt.s32.totalorder %s215, 16
      %s223 = scalar_select %p222, %s215, 16
      %s224 = smul.addr %s221, 17
      %s225 = sadd.s32 %s223, %s224
      %s226 = smul.addr %s225, 4
      %s227 = scalar_lea.vmem %s0, %s226
      %p228 = pneg %p51
      %p229 = pneg %p48
      %p230 = scmp.lt.s32.totalorder %s20, 7
      %s231 = scalar_select %p230, %s20, 7
      %p232 = scmp.lt.s32.totalorder %s21, 0
      %s233 = scalar_select %p232, %s21, 0
      %s234 = sadd.s32 %s233, %s231
      %s235 = scalar_lea.vmem %s1, %s234
      %p236 = pneg %p79
      %p237 = pneg %p76
      %p238 = pneg %p100
      %p239 = pneg %p97
      %p240 = pneg %p128
      %p241 = pneg %p125
      %p242 = scmp.lt.s32.totalorder %s20, 7
      %s243 = scalar_select %p242, %s20, 7
      %p244 = scmp.lt.s32.totalorder %s21, 0
      %s245 = scalar_select %p244, %s21, 0
      %s246 = smul.addr %s243, 2
      %s247 = sadd.s32 %s245, %s246
      %s248 = smul.addr %s247, 8
      %s249 = scalar_lea.vmem %s3, %s248
      %p250 = pneg %p156
      %p251 = pneg %p153
      %p252 = scmp.lt.s32.totalorder %s20, 7
      %s253 = scalar_select %p252, %s20, 7
      %p254 = scmp.lt.s32.totalorder %s21, 0
      %s255 = scalar_select %p254, %s21, 0
      %s256 = smul.addr %s253, 2
      %s257 = sadd.s32 %s255, %s256
      %s258 = smul.addr %s257, 8
      %s259 = scalar_lea.vmem %s4, %s258
      %s260 = smul.u32 16, %s21
      %s261 = ssub.s32 17, %s260
      %p262 = scmp.lt.s32.totalorder %s261, 16
      %s263 = scalar_select %p262, %s261, 16
      %s264 = smul.u32 64, %s263
      %p265 = scmp.lt.s32.totalorder %s20, 7
      %s266 = scalar_select %p265, %s20, 7
      %p267 = scmp.lt.s32.totalorder %s260, 16
      %s268 = scalar_select %p267, %s260, 16
      %s269 = smul.addr %s266, 17
      %s270 = sadd.s32 %s268, %s269
      %s271 = smul.addr %s270, 4
      %s272 = scalar_lea.vmem %s0, %s271
      %s273 = smul.u32 16, %s21
      %s274 = ssub.s32 17, %s273
      %p275 = scmp.lt.s32.totalorder %s274, 16
      %s276 = scalar_select %p275, %s274, 16
      %s277 = smul.u32 64, %s276
      %p278 = scmp.lt.s32.totalorder %s20, 7
      %s279 = scalar_select %p278, %s20, 7
      %p280 = scmp.lt.s32.totalorder %s21, 0
      %s281 = scalar_select %p280, %s21, 0
      %s282 = sadd.s32 %s281, %s279
      %s283 = scalar_lea.vmem %s1, %s282
      %p284 = scmp.lt.s32.totalorder %s20, 7
      %s285 = scalar_select %p284, %s20, 7
      %p286 = scmp.lt.s32.totalorder %s21, 0
      %s287 = scalar_select %p286, %s21, 0
      %s288 = smul.addr %s285, 2
      %s289 = sadd.s32 %s287, %s288
      %s290 = smul.addr %s289, 8
      %s291 = scalar_lea.vmem %s3, %s290
      %p292 = scmp.lt.s32.totalorder %s20, 7
      %s293 = scalar_select %p292, %s20, 7
      %p294 = scmp.lt.s32.totalorder %s21, 0
      %s295 = scalar_select %p294, %s21, 0
      %s296 = smul.addr %s293, 2
      %s297 = sadd.s32 %s295, %s296
      %s298 = smul.addr %s297, 8
      %s299 = scalar_lea.vmem %s4, %s298
      %v301 = vld [vmem:[%s272] sm:$0xf]
      %v302 = vld [vmem:[%s272 + $0x4] sm:$0xf]
      %v303 = vld [vmem:[%s272 + $0x8] sm:$0xf]
      %v304 = vld [vmem:[%s272 + $0xc] sm:$0xf]
      %v305 = vld [vmem:[%s272 + $0x10] sm:$0xf]
      %v306 = vld [vmem:[%s272 + $0x14] sm:$0xf]
      %v307 = vld [vmem:[%s272 + $0x18] sm:$0xf]
      %v308 = vld [vmem:[%s272 + $0x1c] sm:$0xf]
      %v309 = vld [vmem:[%s272 + $0x20] sm:$0xf]
      %v310 = vld [vmem:[%s272 + $0x24] sm:$0xf]
      %v311 = vld [vmem:[%s272 + $0x28] sm:$0xf]
      %v312 = vld [vmem:[%s272 + $0x2c] sm:$0xf]
      %v313 = vld [vmem:[%s272 + $0x30] sm:$0xf]
      %v314 = vld [vmem:[%s272 + $0x34] sm:$0xf]
      %v315 = vld [vmem:[%s272 + $0x38] sm:$0xf]
      %v316 = vld [vmem:[%s272 + $0x3c] sm:$0xf]
      %v317 = vld [vmem:[%s283] sm:$0x1]
      %v334 = vunpack.c.l.b16 %v301
      %v335 = vunpack.c.l.b16 %v302
      %v336 = vunpack.c.l.b16 %v303
      %v337 = vunpack.c.l.b16 %v304
      %v338 = vunpack.c.l.b16 %v305
      %v339 = vunpack.c.l.b16 %v306
      %v340 = vunpack.c.l.b16 %v307
      %v341 = vunpack.c.l.b16 %v308
      %v342 = vunpack.c.l.b16 %v309
      %v343 = vunpack.c.l.b16 %v310
      %v344 = vunpack.c.l.b16 %v311
      %v345 = vunpack.c.l.b16 %v312
      %v346 = vunpack.c.l.b16 %v313
      %v347 = vunpack.c.l.b16 %v314
      %v348 = vunpack.c.l.b16 %v315
      %v349 = vunpack.c.l.b16 %v316
      %v350 = vpack.c.b16 %v335, %v334
      %v351 = vpack.c.b16 %v337, %v336
      %v352 = vpack.c.b16 %v339, %v338
      %v353 = vpack.c.b16 %v341, %v340
      %v354 = vpack.c.b16 %v343, %v342
      %v355 = vpack.c.b16 %v345, %v344
      %v356 = vpack.c.b16 %v347, %v346
      %v357 = vpack.c.b16 %v349, %v348
      %vm358 = vsmask.f32 7424
      %v360 = vshrl.u32 %v350, 16
      %v362 = vshll.u32 %v350, 16
      %v364 = vrot.slane %v362, 1
      %v365 = vor.u32 %v360, %v364
      %v367 = vshll.u32 %v351, 16
      %v369 = vrot.slane %v367, 1
      %v370 = vsel %vm358, %v365, %v369
      %v371 = vshrl.u32 %v351, 16
      %v373 = vor.u32 %v371, %v369
      %v375 = vshll.u32 %v352, 16
      %v377 = vrot.slane %v375, 1
      %v378 = vsel %vm358, %v373, %v377
      %v379 = vshrl.u32 %v352, 16
      %v381 = vor.u32 %v379, %v377
      %v383 = vshll.u32 %v353, 16
      %v385 = vrot.slane %v383, 1
      %v386 = vsel %vm358, %v381, %v385
      %v387 = vshrl.u32 %v353, 16
      %v389 = vor.u32 %v387, %v385
      %v391 = vshll.u32 %v354, 16
      %v393 = vrot.slane %v391, 1
      %v394 = vsel %vm358, %v389, %v393
      %v395 = vshrl.u32 %v354, 16
      %v397 = vor.u32 %v395, %v393
      %v399 = vshll.u32 %v355, 16
      %v401 = vrot.slane %v399, 1
      %v402 = vsel %vm358, %v397, %v401
      %v403 = vshrl.u32 %v355, 16
      %v405 = vor.u32 %v403, %v401
      %v407 = vshll.u32 %v356, 16
      %v409 = vrot.slane %v407, 1
      %v410 = vsel %vm358, %v405, %v409
      %v411 = vshrl.u32 %v356, 16
      %v413 = vor.u32 %v411, %v409
      %v415 = vshll.u32 %v357, 16
      %v417 = vrot.slane %v415, 1
      %v418 = vsel %vm358, %v413, %v417
      %v419 = vshrl.u32 %v357, 16
      %v421 = vor.u32 %v419, %v417
      %v423 = vshll.u32 %v317, 16
      %v425 = vrot.slane %v423, 1
      %v426 = vsel %vm358, %v421, %v425
      %427 = vrot.lane.b32.xlu0 %v370, 8
      %v428 = vpop.permute.xlu0 %427
      %429 = vrot.lane.b32.xlu0 %v378, 8
      %v430 = vpop.permute.xlu0 %429
      %431 = vrot.lane.b32.xlu0 %v386, 8
      %v432 = vpop.permute.xlu0 %431
      %433 = vrot.lane.b32.xlu0 %v394, 8
      %v434 = vpop.permute.xlu0 %433
      %435 = vrot.lane.b32.xlu0 %v402, 8
      %v436 = vpop.permute.xlu0 %435
      %437 = vrot.lane.b32.xlu0 %v410, 8
      %v438 = vpop.permute.xlu0 %437
      %439 = vrot.lane.b32.xlu0 %v418, 8
      %v440 = vpop.permute.xlu0 %439
      %441 = vrot.lane.b32.xlu0 %v426, 8
      %v442 = vpop.permute.xlu0 %441
      %vm443 = vcmask 64512
      %v445 = vsel %vm443, %v350, %v428
      %v447 = vsel %vm443, %v351, %v430
      %v449 = vsel %vm443, %v352, %v432
      %v451 = vsel %vm443, %v353, %v434
      %v453 = vsel %vm443, %v354, %v436
      %v455 = vsel %vm443, %v355, %v438
      %v457 = vsel %vm443, %v356, %v440
      %v459 = vsel %vm443, %v357, %v442
      %v460 = vld [vmem:[%s2] sm:$0xf]
      %v461 = vld [vmem:[%s2 + $0x4] sm:$0xf]
      %v462 = vld [vmem:[%s2 + $0x8] sm:$0xf]
      %v463 = vld [vmem:[%s2 + $0xc] sm:$0x1]
      %v468 = vunpack.c.l.b16 %v460
      %v469 = vunpack.c.l.b16 %v461
      %v470 = vunpack.c.l.b16 %v462
      %v471 = vunpack.c.l.b16 %v463
      %v472 = vpack.c.b16 %v469, %v468
      %v473 = vpack.c.b16 %v471, %v470
      %vm474 = vcmask 130048
      %v476 = vsel %vm474, %v472, 0
      %v479 = vsel %vm474, %v473, 0
      %v481 = vsel %vm474, %v445, 0
      %v483 = vsel %vm474, %v447, 0
      %v485 = vsel %vm474, %v449, 0
      %v487 = vsel %vm474, %v451, 0
      %v489 = vsel %vm474, %v453, 0
      %v491 = vsel %vm474, %v455, 0
      %v493 = vsel %vm474, %v457, 0
      %v495 = vsel %vm474, %v459, 0
      %497 = vmatprep.subr.bf16.mxu0 0
      %498 = vmatpush1.bf16.xpose.msra.mxu0 %v495
      %499 = vmatprep.subr.bf16.mxu0 0
      %500 = vmatpush1.bf16.xpose.msra.mxu0 %v493
      %501 = vmatprep.subr.bf16.mxu0 0
      %502 = vmatpush1.bf16.xpose.msra.mxu0 %v491
      %503 = vmatprep.subr.bf16.mxu0 0
      %504 = vmatpush1.bf16.xpose.msra.mxu0 %v489
      %505 = vmatprep.subr.bf16.mxu0 0
      %506 = vmatpush1.bf16.xpose.msra.mxu0 %v487
      %507 = vmatprep.subr.bf16.mxu0 0
      %508 = vmatpush1.bf16.xpose.msra.mxu0 %v485
      %509 = vmatprep.subr.bf16.mxu0 0
      %510 = vmatpush1.bf16.xpose.msra.mxu0 %v483
      %511 = vmatprep.subr.bf16.mxu0 0
      %512 = vmatpush1.bf16.xpose.msra.mxu0 %v481
      %513 = vmatprep.subr.bf16.mxu0 0
      %514 = vmatpush2.bf16.xpose.msra.mxu0 0
      %515 = vmatprep.subr.bf16.mxu0 0
      %516 = vmatpush2.bf16.xpose.msra.mxu0 0
      %517 = vmatprep.subr.bf16.mxu0 0
      %518 = vmatpush2.bf16.xpose.msra.mxu0 0
      %519 = vmatprep.subr.bf16.mxu0 0
      %520 = vmatpush2.bf16.xpose.msra.mxu0 0
      %521 = vmatprep.subr.bf16.mxu0 0
      %522 = vmatpush2.bf16.xpose.msra.mxu0 0
      %523 = vmatprep.subr.bf16.mxu0 0
      %524 = vmatpush2.bf16.xpose.msra.mxu0 0
      %525 = vmatprep.subr.bf16.mxu0 0
      %526 = vmatpush2.bf16.xpose.msra.mxu0 0
      %527 = vmatprep.subr.bf16.mxu0 0
      %528 = vmatpush2.bf16.xpose.msra.mxu0 0
      %529 = vmatprep.mubr.bf16.mxu0 0
      %530 = vmatmul.mubr.bf16.gmra.mxu0 %v476
      %v531 = vpop.f32.mrf.mxu0
      %v532 = vadd.f32 0.0, %v531
      %v533 = vpop.f32.mrf.mxu0
      %v534 = vpop.f32.mrf.mxu0
      %v535 = vadd.f32 0.0, %v534
      %v536 = vpop.f32.mrf.mxu0
      %537 = vmatprep.mubr.bf16.mxu0 0
      %538 = vmatmul.mubr.bf16.gmra.mxu0 %v479
      %v539 = vpop.f32.mrf.mxu0
      %v540 = vadd.f32 0.0, %v539
      %v541 = vpop.f32.mrf.mxu0
      %v542 = vpop.f32.mrf.mxu0
      %v543 = vadd.f32 0.0, %v542
      %v544 = vpop.f32.mrf.mxu0
      %545 = vdwg.mxu0
      %546 = vst [vmem:[%s291] sm:$0xff] %v532
      %547 = vst [vmem:[%s291 + $0x8] sm:$0x1] %v535
      %548 = vst [vmem:[%s299] sm:$0xff] %v540
      %549 = vst [vmem:[%s299 + $0x8] sm:$0x1] %v543
      %p550 = scmp.lt.s32.totalorder %s20, 7
      %s551 = scalar_select %p550, %s20, 7
      %p552 = scmp.lt.s32.totalorder %s21, 0
      %s553 = scalar_select %p552, %s21, 0
      %s554 = smul.addr %s551, 2
      %s555 = sadd.s32 %s553, %s554
      %s556 = smul.addr %s555, 8
      %s557 = scalar_lea.vmem %s3, %s556
      %p558 = scmp.lt.s32.totalorder %s20, 7
      %s559 = scalar_select %p558, %s20, 7
      %p560 = scmp.lt.s32.totalorder %s21, 0
      %s561 = scalar_select %p560, %s21, 0
      %s562 = smul.addr %s559, 2
      %s563 = sadd.s32 %s561, %s562
      %s564 = smul.addr %s563, 8
      %s565 = scalar_lea.vmem %s4, %s564
      // Predicated region
      $region33: #{forward.2} parent=31 // pred_check
        %p566 = pneg %p125
      $region34: #{forward.2} parent=31 // pred_check_branch
        %568 = sbr.rel (%p566) target = $region36
      $region35: #{forward.2} parent=31 // pred_region
        _
      $region36: #{forward.2} parent=31 // pred_fallthru
        _
      // Predicated region
      $region37: #{forward.2} parent=31 // pred_check
        %p569 = pneg %p153
      $region38: #{forward.2} parent=31 // pred_check_branch
        %571 = sbr.rel (%p569) target = $region40
      $region39: #{forward.2} parent=31 // pred_region
        _
      $region40: #{forward.2} parent=31 // pred_fallthru
        _
    $region32: #{forward.2} parent=5 // pred_fallthru
      _
    %p572 = scmp.le.s32.totalorder 2, %s11
    // Predicated region
    $region41: #{forward.2} parent=5 // pred_check
      %p573 = pneg %p572
    $region42: #{forward.2} parent=5 // pred_check_branch
      %575 = sbr.rel (%p573) target = $region44
    $region43: #{forward.2} parent=5 // pred_region
      %s576 = ssub.s32 %s11, 2
      // Predicated region
      $region45: #{forward.2} parent=43 // pred_check
        %p577 = pneg %p131
      $region46: #{forward.2} parent=43 // pred_check_branch
        %579 = sbr.rel (%p577) target = $region48
      $region47: #{forward.2} parent=43 // pred_region
        %p580 = scmp.lt.s32.totalorder %s22, 7
        %s581 = scalar_select %p580, %s22, 7
        %p582 = scmp.lt.s32.totalorder %s23, 0
        %s583 = scalar_select %p582, %s23, 0
        %s584 = smul.addr %s581, 2
        %s585 = sadd.s32 %s583, %s584
        %s586 = smul.addr %s585, 8
        %s587 = scalar_lea.vmem %s3, %s586
      $region48: #{forward.2} parent=43 // pred_fallthru
        _
      // Predicated region
      $region49: #{forward.2} parent=43 // pred_check
        %p588 = pneg %p159
      $region50: #{forward.2} parent=43 // pred_check_branch
        %590 = sbr.rel (%p588) target = $region52
      $region51: #{forward.2} parent=43 // pred_region
        %p591 = scmp.lt.s32.totalorder %s22, 7
        %s592 = scalar_select %p591, %s22, 7
        %p593 = scmp.lt.s32.totalorder %s23, 0
        %s594 = scalar_select %p593, %s23, 0
        %s595 = smul.addr %s592, 2
        %s596 = sadd.s32 %s594, %s595
        %s597 = smul.addr %s596, 8
        %s598 = scalar_lea.vmem %s4, %s597
      $region52: #{forward.2} parent=43 // pred_fallthru
        _
    $region44: #{forward.2} parent=5 // pred_fallthru
      _
  $region6: #{forward.2} parent=0 // loop_footer
    %s15 = sadd.s32 1, %s11
  $region7: #{forward.2} parent=0 // loop_footer_branch
    %10 = sbr.rel target = $region3
  $region8: #{forward.2} parent=0 // loop_exit
    _

// kernel: forward.3
$region0: #{forward.3}
  #allocation0 [shape = 'u32[]', space=smem, size = 0x4, offset = 0x4, fixed_abs, tag = 'smem constant byte address 0x4 - core index']
  #allocation1 [shape = 'u32[144,128]{1,0:T(1,128)}', space=vmem, size = 0x12000, scoped, tag = 'internal scratch']
  %s0 = inlined_call_operand.vmem [shape: f32[4,129,8], index: 0, kind: input, shape index: {}]
  %s1 = inlined_call_operand.vmem [shape: f32[4,1,1,8], index: 1, kind: input, shape index: {}]
  %s2 = inlined_call_operand.vmem [shape: f32[8,16], index: 2, kind: input, shape index: {}]
  %s3 = inlined_call_operand.vmem [shape: s32[4,8,128], index: 3, kind: output, shape index: {}]
  %s4 = sld [smem:[#allocation0]]
  $region45: #{forward.3} parent=0
    _
  %s6 = ssub.s32 1, %s4
  %s7 = scalar_select 0, %s6, %s4
  loop: start=0, step=1, limit=6
  $region2: #{forward.3} parent=0 // loop_pre_header
    _
  $region3: #{forward.3} parent=0 // loop_header
    %s9 = sphi 0, %s13
    %p10 = scmp.ge.s32.totalorder %s9, 6
    %s16 = sphi 0, %s28
    %s17 = sphi 0, %s24
    %s18 = sphi 0, %s16
    %s19 = sphi 0, %s17
    %s20 = sphi 0, %s18
    %s21 = sphi 0, %s19
    %s33 = sphi 0, %s35
    %s36 = sphi 0, %s33
    %s37 = sphi 0, %s36
    %s53 = sphi 0, %s37
    %s61 = sphi 0, %s63
    %s64 = sphi 0, %s61
    %s65 = sphi 0, %s64
    %s81 = sphi 0, %s65
    %s85 = sphi 0, %s85
    %s87 = sphi 0, %s85
    %s88 = sphi 0, %s87
    %s102 = sphi 0, %s88
    %s110 = sphi 0, %s112
    %s113 = sphi 0, %s110
    %s114 = sphi 0, %s113
    %s130 = sphi 0, %s114
  $region4: #{forward.3} parent=0 // loop_header_branch
    %12 = sbr.rel (%p10) target = $region8
  $region5: #{forward.3} parent=0 // loop_body
    %s14 = ssub.s32 %s9, 1
    %s15 = ssub.s32 %s9, 2
    %s22 = sadd.s32 1, %s17
    %p23 = scmp.ge.s32.totalorder %s22, 1
    %s24 = scalar_select %p23, 0, %s22
    %s25 = sadd.s32 1, %s16
    %s26 = scalar_select %p23, %s25, %s16
    %p27 = scmp.ge.s32.totalorder %s26, 4
    %s28 = scalar_select %p27, 0, %s26
    %s29 = ssub.s32 %s16, %s28
    %s30 = ssub.s32 %s17, %s24
    %s31 = sor.u32 %s29, %s30
    %p32 = scmp.eq.s32.totalorder %s31, 0
    %s34 = sadd.s32 %s33, 1
    %s35 = scalar_select %p32, %s33, %s34
    %p38 = pneg %p32
    %p39 = scmp.eq.s32.totalorder %s9, 3
    %p40 = por %p38, %p39
    %p41 = scmp.ne.s32.totalorder %s33, %s36
    %p42 = scmp.eq.s32.totalorder %s9, 0
    %p43 = por %p41, %p42
    %p44 = scmp.ne.s32.totalorder %s33, %s36
    %p45 = scmp.eq.s32.totalorder %s14, 3
    %p46 = por %p44, %p45
    %p47 = scmp.ne.s32.totalorder %s36, %s37
    %p48 = scmp.eq.s32.totalorder %s14, 0
    %p49 = por %p47, %p48
    %p50 = scmp.ne.s32.totalorder %s36, %s37
    %p51 = scmp.eq.s32.totalorder %s15, 3
    %p52 = por %p50, %p51
    %p54 = scmp.ne.s32.totalorder %s37, %s53
    %p55 = scmp.eq.s32.totalorder %s15, 0
    %p56 = por %p54, %p55
    %s57 = ssub.s32 %s16, %s28
    %s58 = ssub.s32 %s17, %s24
    %s59 = sor.u32 %s57, %s58
    %p60 = scmp.eq.s32.totalorder %s59, 0
    %s62 = sadd.s32 %s61, 1
    %s63 = scalar_select %p60, %s61, %s62
    %p66 = pneg %p60
    %p67 = scmp.eq.s32.totalorder %s9, 3
    %p68 = por %p66, %p67
    %p69 = scmp.ne.s32.totalorder %s61, %s64
    %p70 = scmp.eq.s32.totalorder %s9, 0
    %p71 = por %p69, %p70
    %p72 = scmp.ne.s32.totalorder %s61, %s64
    %p73 = scmp.eq.s32.totalorder %s14, 3
    %p74 = por %p72, %p73
    %p75 = scmp.ne.s32.totalorder %s64, %s65
    %p76 = scmp.eq.s32.totalorder %s14, 0
    %p77 = por %p75, %p76
    %p78 = scmp.ne.s32.totalorder %s64, %s65
    %p79 = scmp.eq.s32.totalorder %s15, 3
    %p80 = por %p78, %p79
    %p82 = scmp.ne.s32.totalorder %s65, %s81
    %p83 = scmp.eq.s32.totalorder %s15, 0
    %p84 = por %p82, %p83
    %s86 = sadd.s32 %s85, 1
    %p89 = scmp.eq.s32.totalorder %s9, 3
    %p90 = scmp.ne.s32.totalorder %s85, %s87
    %p91 = scmp.eq.s32.totalorder %s9, 0
    %p92 = por %p90, %p91
    %p93 = scmp.ne.s32.totalorder %s85, %s87
    %p94 = scmp.eq.s32.totalorder %s14, 3
    %p95 = por %p93, %p94
    %p96 = scmp.ne.s32.totalorder %s87, %s88
    %p97 = scmp.eq.s32.totalorder %s14, 0
    %p98 = por %p96, %p97
    %p99 = scmp.ne.s32.totalorder %s87, %s88
    %p100 = scmp.eq.s32.totalorder %s15, 3
    %p101 = por %p99, %p100
    %p103 = scmp.ne.s32.totalorder %s88, %s102
    %p104 = scmp.eq.s32.totalorder %s15, 0
    %p105 = por %p103, %p104
    %s106 = ssub.s32 %s16, %s28
    %s107 = ssub.s32 %s17, %s24
    %s108 = sor.u32 %s106, %s107
    %p109 = scmp.eq.s32.totalorder %s108, 0
    %s111 = sadd.s32 %s110, 1
    %s112 = scalar_select %p109, %s110, %s111
    %p115 = pneg %p109
    %p116 = scmp.eq.s32.totalorder %s9, 3
    %p117 = por %p115, %p116
    %p118 = scmp.ne.s32.totalorder %s110, %s113
    %p119 = scmp.eq.s32.totalorder %s9, 0
    %p120 = por %p118, %p119
    %p121 = scmp.ne.s32.totalorder %s110, %s113
    %p122 = scmp.eq.s32.totalorder %s14, 3
    %p123 = por %p121, %p122
    %p124 = scmp.ne.s32.totalorder %s113, %s114
    %p125 = scmp.eq.s32.totalorder %s14, 0
    %p126 = por %p124, %p125
    %p127 = scmp.ne.s32.totalorder %s113, %s114
    %p128 = scmp.eq.s32.totalorder %s15, 3
    %p129 = por %p127, %p128
    %p131 = scmp.ne.s32.totalorder %s114, %s130
    %p132 = scmp.eq.s32.totalorder %s15, 0
    %p133 = por %p131, %p132
    %p134 = scmp.le.s32.totalorder 1, %s9
    %p135 = scmp.lt.s32.totalorder %s9, 5
    %p136 = pnand %p134, %p135
    %p137 = pneg %p136
    // Predicated region
    $region9: #{forward.3} parent=5 // pred_check
      _
    $region10: #{forward.3} parent=5 // pred_check_branch
      %139 = sbr.rel (%p136) target = $region12
    $region11: #{forward.3} parent=5 // pred_region
      %s140 = ssub.s32 %s9, 1
      // Predicated region
      $region13: #{forward.3} parent=11 // pred_check
        %p141 = pneg %p98
      $region14: #{forward.3} parent=11 // pred_check_branch
        %143 = sbr.rel (%p141) target = $region16
      $region15: #{forward.3} parent=11 // pred_region
        _
      $region16: #{forward.3} parent=11 // pred_fallthru
        _
    $region12: #{forward.3} parent=5 // pred_fallthru
      _
    %p144 = scmp.lt.s32.totalorder %s9, 4
    // Predicated region
    $region17: #{forward.3} parent=5 // pred_check
      %p145 = pneg %p144
    $region18: #{forward.3} parent=5 // pred_check_branch
      %147 = sbr.rel (%p145) target = $region20
    $region19: #{forward.3} parent=5 // pred_region
      // Predicated region
      $region21: #{forward.3} parent=19 // pred_check
        %p148 = pneg %p43
      $region22: #{forward.3} parent=19 // pred_check_branch
        %150 = sbr.rel (%p148) target = $region24
      $region23: #{forward.3} parent=19 // pred_region
        %s151 = smul.u32 16, %s17
        %s152 = ssub.s32 17, %s151
        %p153 = scmp.lt.s32.totalorder %s152, 16
        %s154 = scalar_select %p153, %s152, 16
        %s155 = smul.u32 128, %s154
        %p156 = scmp.lt.s32.totalorder %s16, 3
        %s157 = scalar_select %p156, %s16, 3
        %p158 = scmp.lt.s32.totalorder %s151, 16
        %s159 = scalar_select %p158, %s151, 16
        %s160 = smul.addr %s157, 17
        %s161 = sadd.s32 %s159, %s160
        %s162 = smul.addr %s161, 8
        %s163 = scalar_lea.vmem %s0, %s162
        %s164 = smul.u32 16, %s17
        %s165 = ssub.s32 17, %s164
        %p166 = scmp.lt.s32.totalorder %s165, 16
        %s167 = scalar_select %p166, %s165, 16
        %s168 = smul.u32 128, %s167
      $region24: #{forward.3} parent=19 // pred_fallthru
        _
      // Predicated region
      $region25: #{forward.3} parent=19 // pred_check
        %p169 = pneg %p71
      $region26: #{forward.3} parent=19 // pred_check_branch
        %171 = sbr.rel (%p169) target = $region28
      $region27: #{forward.3} parent=19 // pred_region
        %p172 = scmp.lt.s32.totalorder %s16, 3
        %s173 = scalar_select %p172, %s16, 3
        %p174 = scmp.lt.s32.totalorder %s17, 0
        %s175 = scalar_select %p174, %s17, 0
        %s176 = sadd.s32 %s175, %s173
        %s177 = scalar_lea.vmem %s1, %s176
      $region28: #{forward.3} parent=19 // pred_fallthru
        _
    $region20: #{forward.3} parent=5 // pred_fallthru
      _
    %p178 = scmp.le.s32.totalorder 1, %s9
    %p179 = scmp.lt.s32.totalorder %s9, 5
    %p180 = pnand %p178, %p179
    %p181 = pneg %p180
    // Predicated region
    $region29: #{forward.3} parent=5 // pred_check
      _
    $region30: #{forward.3} parent=5 // pred_check_branch
      %183 = sbr.rel (%p180) target = $region32
    $region31: #{forward.3} parent=5 // pred_region
      %s184 = ssub.s32 %s9, 1
      %s185 = smul.u32 16, %s19
      %s186 = ssub.s32 17, %s185
      %p187 = scmp.lt.s32.totalorder %s186, 16
      %s188 = scalar_select %p187, %s186, 16
      %s189 = smul.u32 128, %s188
      %p190 = scmp.lt.s32.totalorder %s18, 3
      %s191 = scalar_select %p190, %s18, 3
      %p192 = scmp.lt.s32.totalorder %s185, 16
      %s193 = scalar_select %p192, %s185, 16
      %s194 = smul.addr %s191, 17
      %s195 = sadd.s32 %s193, %s194
      %s196 = smul.addr %s195, 8
      %s197 = scalar_lea.vmem %s0, %s196
      %p198 = pneg %p49
      %p199 = pneg %p46
      %p200 = scmp.lt.s32.totalorder %s18, 3
      %s201 = scalar_select %p200, %s18, 3
      %p202 = scmp.lt.s32.totalorder %s19, 0
      %s203 = scalar_select %p202, %s19, 0
      %s204 = sadd.s32 %s203, %s201
      %s205 = scalar_lea.vmem %s1, %s204
      %p206 = pneg %p77
      %p207 = pneg %p74
      %p208 = pneg %p98
      %p209 = pneg %p95
      %p210 = pneg %p126
      %p211 = pneg %p123
      %p212 = scmp.lt.s32.totalorder %s18, 3
      %s213 = scalar_select %p212, %s18, 3
      %p214 = scmp.lt.s32.totalorder %s19, 0
      %s215 = scalar_select %p214, %s19, 0
      %s216 = sadd.s32 %s215, %s213
      %s217 = smul.addr %s216, 8
      %s218 = scalar_lea.vmem %s3, %s217
      %s219 = smul.u32 16, %s19
      %s220 = ssub.s32 17, %s219
      %p221 = scmp.lt.s32.totalorder %s220, 16
      %s222 = scalar_select %p221, %s220, 16
      %s223 = smul.u32 128, %s222
      %p224 = scmp.lt.s32.totalorder %s18, 3
      %s225 = scalar_select %p224, %s18, 3
      %p226 = scmp.lt.s32.totalorder %s219, 16
      %s227 = scalar_select %p226, %s219, 16
      %s228 = smul.addr %s225, 17
      %s229 = sadd.s32 %s227, %s228
      %s230 = smul.addr %s229, 8
      %s231 = scalar_lea.vmem %s0, %s230
      %s232 = smul.u32 16, %s19
      %s233 = ssub.s32 17, %s232
      %p234 = scmp.lt.s32.totalorder %s233, 16
      %s235 = scalar_select %p234, %s233, 16
      %s236 = smul.u32 128, %s235
      %p237 = scmp.lt.s32.totalorder %s18, 3
      %s238 = scalar_select %p237, %s18, 3
      %p239 = scmp.lt.s32.totalorder %s19, 0
      %s240 = scalar_select %p239, %s19, 0
      %s241 = sadd.s32 %s240, %s238
      %s242 = scalar_lea.vmem %s1, %s241
      %p243 = scmp.lt.s32.totalorder %s18, 3
      %s244 = scalar_select %p243, %s18, 3
      %p245 = scmp.lt.s32.totalorder %s19, 0
      %s246 = scalar_select %p245, %s19, 0
      %s247 = sadd.s32 %s246, %s244
      %s248 = smul.addr %s247, 8
      %s249 = scalar_lea.vmem %s3, %s248
      %v250 = vld [vmem:[%s231] sm:$0xff]
      %v251 = vld [vmem:[%s231 + $0x8] sm:$0xff]
      %v252 = vld [vmem:[%s231 + $0x10] sm:$0xff]
      %v253 = vld [vmem:[%s231 + $0x18] sm:$0xff]
      %v254 = vld [vmem:[%s231 + $0x20] sm:$0xff]
      %v255 = vld [vmem:[%s231 + $0x28] sm:$0xff]
      %v256 = vld [vmem:[%s231 + $0x30] sm:$0xff]
      %v257 = vld [vmem:[%s231 + $0x38] sm:$0xff]
      %v258 = vld [vmem:[%s231 + $0x40] sm:$0xff]
      %v259 = vld [vmem:[%s231 + $0x48] sm:$0xff]
      %v260 = vld [vmem:[%s231 + $0x50] sm:$0xff]
      %v261 = vld [vmem:[%s231 + $0x58] sm:$0xff]
      %v262 = vld [vmem:[%s231 + $0x60] sm:$0xff]
      %v263 = vld [vmem:[%s231 + $0x68] sm:$0xff]
      %v264 = vld [vmem:[%s231 + $0x70] sm:$0xff]
      %v265 = vld [vmem:[%s231 + $0x78] sm:$0xff]
      %v266 = vld [vmem:[%s242] sm:$0x1]
      %vm284 = vcmask 1046528
      %v285 = vrot.slane %v250, 1
      %v286 = vrot.slane %v251, 1
      %v287 = vsel %vm284, %v285, %v286
      %v288 = vrot.slane %v252, 1
      %v289 = vsel %vm284, %v286, %v288
      %v290 = vrot.slane %v253, 1
      %v291 = vsel %vm284, %v288, %v290
      %v292 = vrot.slane %v254, 1
      %v293 = vsel %vm284, %v290, %v292
      %v294 = vrot.slane %v255, 1
      %v295 = vsel %vm284, %v292, %v294
      %v296 = vrot.slane %v256, 1
      %v297 = vsel %vm284, %v294, %v296
      %v298 = vrot.slane %v257, 1
      %v299 = vsel %vm284, %v296, %v298
      %v300 = vrot.slane %v258, 1
      %v301 = vsel %vm284, %v298, %v300
      %v302 = vrot.slane %v259, 1
      %v303 = vsel %vm284, %v300, %v302
      %v304 = vrot.slane %v260, 1
      %v305 = vsel %vm284, %v302, %v304
      %v306 = vrot.slane %v261, 1
      %v307 = vsel %vm284, %v304, %v306
      %v308 = vrot.slane %v262, 1
      %v309 = vsel %vm284, %v306, %v308
      %v310 = vrot.slane %v263, 1
      %v311 = vsel %vm284, %v308, %v310
      %v312 = vrot.slane %v264, 1
      %v313 = vsel %vm284, %v310, %v312
      %v314 = vrot.slane %v265, 1
      %v315 = vsel %vm284, %v312, %v314
      %v316 = vrot.slane %v266, 1
      %v317 = vsel %vm284, %v314, %v316
      %318 = vrot.lane.b32.xlu0 %v287, 8
      %v319 = vpop.permute.xlu0 %318
      %320 = vrot.lane.b32.xlu0 %v289, 8
      %v321 = vpop.permute.xlu0 %320
      %322 = vrot.lane.b32.xlu0 %v291, 8
      %v323 = vpop.permute.xlu0 %322
      %324 = vrot.lane.b32.xlu0 %v293, 8
      %v325 = vpop.permute.xlu0 %324
      %326 = vrot.lane.b32.xlu0 %v295, 8
      %v327 = vpop.permute.xlu0 %326
      %328 = vrot.lane.b32.xlu0 %v297, 8
      %v329 = vpop.permute.xlu0 %328
      %330 = vrot.lane.b32.xlu0 %v299, 8
      %v331 = vpop.permute.xlu0 %330
      %332 = vrot.lane.b32.xlu0 %v301, 8
      %v333 = vpop.permute.xlu0 %332
      %334 = vrot.lane.b32.xlu0 %v303, 8
      %v335 = vpop.permute.xlu0 %334
      %336 = vrot.lane.b32.xlu0 %v305, 8
      %v337 = vpop.permute.xlu0 %336
      %338 = vrot.lane.b32.xlu0 %v307, 8
      %v339 = vpop.permute.xlu0 %338
      %340 = vrot.lane.b32.xlu0 %v309, 8
      %v341 = vpop.permute.xlu0 %340
      %342 = vrot.lane.b32.xlu0 %v311, 8
      %v343 = vpop.permute.xlu0 %342
      %344 = vrot.lane.b32.xlu0 %v313, 8
      %v345 = vpop.permute.xlu0 %344
      %346 = vrot.lane.b32.xlu0 %v315, 8
      %v347 = vpop.permute.xlu0 %346
      %348 = vrot.lane.b32.xlu0 %v317, 8
      %v349 = vpop.permute.xlu0 %348
      %vm366 = vcmask 64512
      %v367 = vsel %vm366, %v250, %v319
      %v368 = vsel %vm366, %v251, %v321
      %v369 = vsel %vm366, %v252, %v323
      %v370 = vsel %vm366, %v253, %v325
      %v371 = vsel %vm366, %v254, %v327
      %v372 = vsel %vm366, %v255, %v329
      %v373 = vsel %vm366, %v256, %v331
      %v374 = vsel %vm366, %v257, %v333
      %v375 = vsel %vm366, %v258, %v335
      %v376 = vsel %vm366, %v259, %v337
      %v377 = vsel %vm366, %v260, %v339
      %v378 = vsel %vm366, %v261, %v341
      %v379 = vsel %vm366, %v262, %v343
      %v380 = vsel %vm366, %v263, %v345
      %v381 = vsel %vm366, %v264, %v347
      %v382 = vsel %vm366, %v265, %v349
      %v383 = vld [vmem:[%s2] sm:$0xff]
      %vm384 = vcmask 130048
      %v386 = vsel %vm384, %v383, 0
      %v389 = vsel %vm384, %v367, 0
      %v392 = vsel %vm384, %v368, 0
      %v395 = vsel %vm384, %v369, 0
      %v398 = vsel %vm384, %v370, 0
      %v401 = vsel %vm384, %v371, 0
      %v404 = vsel %vm384, %v372, 0
      %v407 = vsel %vm384, %v373, 0
      %v410 = vsel %vm384, %v374, 0
      %v413 = vsel %vm384, %v375, 0
      %v416 = vsel %vm384, %v376, 0
      %v419 = vsel %vm384, %v377, 0
      %v422 = vsel %vm384, %v378, 0
      %v425 = vsel %vm384, %v379, 0
      %v428 = vsel %vm384, %v380, 0
      %v431 = vsel %vm384, %v381, 0
      %v434 = vsel %vm384, %v382, 0
      %436 = vmatprep.subr.mxu0 0.0
      %437 = vmatpush1.xpose.msra.mxu0 %v434
      %438 = vmatprep.subr.mxu0 0.0
      %439 = vmatpush1.xpose.msra.mxu0 %v431
      %440 = vmatprep.subr.mxu0 0.0
      %441 = vmatpush1.xpose.msra.mxu0 %v428
      %442 = vmatprep.subr.mxu0 0.0
      %443 = vmatpush1.xpose.msra.mxu0 %v425
      %444 = vmatprep.subr.mxu0 0.0
      %445 = vmatpush1.xpose.msra.mxu0 %v422
      %446 = vmatprep.subr.mxu0 0.0
      %447 = vmatpush1.xpose.msra.mxu0 %v419
      %448 = vmatprep.subr.mxu0 0.0
      %449 = vmatpush1.xpose.msra.mxu0 %v416
      %450 = vmatprep.subr.mxu0 0.0
      %451 = vmatpush1.xpose.msra.mxu0 %v413
      %452 = vmatprep.subr.mxu0 0.0
      %453 = vmatpush1.xpose.msra.mxu0 %v410
      %454 = vmatprep.subr.mxu0 0.0
      %455 = vmatpush1.xpose.msra.mxu0 %v407
      %456 = vmatprep.subr.mxu0 0.0
      %457 = vmatpush1.xpose.msra.mxu0 %v404
      %458 = vmatprep.subr.mxu0 0.0
      %459 = vmatpush1.xpose.msra.mxu0 %v401
      %460 = vmatprep.subr.mxu0 0.0
      %461 = vmatpush1.xpose.msra.mxu0 %v398
      %462 = vmatprep.subr.mxu0 0.0
      %463 = vmatpush1.xpose.msra.mxu0 %v395
      %464 = vmatprep.subr.mxu0 0.0
      %465 = vmatpush1.xpose.msra.mxu0 %v392
      %466 = vmatprep.subr.mxu0 0.0
      %467 = vmatpush1.xpose.msra.mxu0 %v389
      %468 = vmatprep.subr.mxu0 0.0
      %469 = vmatpush2.xpose.msra.mxu0 0.0
      %470 = vmatprep.subr.mxu0 0.0
      %471 = vmatpush2.xpose.msra.mxu0 0.0
      %472 = vmatprep.subr.mxu0 0.0
      %473 = vmatpush2.xpose.msra.mxu0 0.0
      %474 = vmatprep.subr.mxu0 0.0
      %475 = vmatpush2.xpose.msra.mxu0 0.0
      %476 = vmatprep.subr.mxu0 0.0
      %477 = vmatpush2.xpose.msra.mxu0 0.0
      %478 = vmatprep.subr.mxu0 0.0
      %479 = vmatpush2.xpose.msra.mxu0 0.0
      %480 = vmatprep.subr.mxu0 0.0
      %481 = vmatpush2.xpose.msra.mxu0 0.0
      %482 = vmatprep.subr.mxu0 0.0
      %483 = vmatpush2.xpose.msra.mxu0 0.0
      %484 = vmatprep.subr.mxu0 0.0
      %485 = vmatpush2.xpose.msra.mxu0 0.0
      %486 = vmatprep.subr.mxu0 0.0
      %487 = vmatpush2.xpose.msra.mxu0 0.0
      %488 = vmatprep.subr.mxu0 0.0
      %489 = vmatpush2.xpose.msra.mxu0 0.0
      %490 = vmatprep.subr.mxu0 0.0
      %491 = vmatpush2.xpose.msra.mxu0 0.0
      %492 = vmatprep.subr.mxu0 0.0
      %493 = vmatpush2.xpose.msra.mxu0 0.0
      %494 = vmatprep.subr.mxu0 0.0
      %495 = vmatpush2.xpose.msra.mxu0 0.0
      %496 = vmatprep.subr.mxu0 0.0
      %497 = vmatpush2.xpose.msra.mxu0 0.0
      %498 = vmatprep.subr.mxu0 0.0
      %499 = vmatpush2.xpose.msra.mxu0 0.0
      %500 = vmatprep.mubr.f32.mxu0 0.0
      %501 = vmatmul.mubr.f32.gmra.mxu0 %v386
      %v502 = vpop.f32.mrf.mxu0
      %v503 = vadd.f32 0.0, %v502
      %v504 = vpop.f32.mrf.mxu0
      %505 = vdwg.mxu0
      %vm506 = vcmp.ge.f32.partialorder %v503, 0.6666667
      %v507 = vsel %vm506, 1, 0
      %508 = vst [vmem:[%s249] sm:$0xff] %v507
      %p509 = scmp.lt.s32.totalorder %s18, 3
      %s510 = scalar_select %p509, %s18, 3
      %p511 = scmp.lt.s32.totalorder %s19, 0
      %s512 = scalar_select %p511, %s19, 0
      %s513 = sadd.s32 %s512, %s510
      %s514 = smul.addr %s513, 8
      %s515 = scalar_lea.vmem %s3, %s514
      // Predicated region
      $region33: #{forward.3} parent=31 // pred_check
        %p516 = pneg %p123
      $region34: #{forward.3} parent=31 // pred_check_branch
        %518 = sbr.rel (%p516) target = $region36
      $region35: #{forward.3} parent=31 // pred_region
        _
      $region36: #{forward.3} parent=31 // pred_fallthru
        _
    $region32: #{forward.3} parent=5 // pred_fallthru
      _
    %p519 = scmp.le.s32.totalorder 2, %s9
    // Predicated region
    $region37: #{forward.3} parent=5 // pred_check
      %p520 = pneg %p519
    $region38: #{forward.3} parent=5 // pred_check_branch
      %522 = sbr.rel (%p520) target = $region40
    $region39: #{forward.3} parent=5 // pred_region
      %s523 = ssub.s32 %s9, 2
      // Predicated region
      $region41: #{forward.3} parent=39 // pred_check
        %p524 = pneg %p129
      $region42: #{forward.3} parent=39 // pred_check_branch
        %526 = sbr.rel (%p524) target = $region44
      $region43: #{forward.3} parent=39 // pred_region
        %p527 = scmp.lt.s32.totalorder %s20, 3
        %s528 = scalar_select %p527, %s20, 3
        %p529 = scmp.lt.s32.totalorder %s21, 0
        %s530 = scalar_select %p529, %s21, 0
        %s531 = sadd.s32 %s530, %s528
        %s532 = smul.addr %s531, 8
        %s533 = scalar_lea.vmem %s3, %s532
      $region44: #{forward.3} parent=39 // pred_fallthru
        _
    $region40: #{forward.3} parent=5 // pred_fallthru
      _
  $region6: #{forward.3} parent=0 // loop_footer
    %s13 = sadd.s32 1, %s9
  $region7: #{forward.3} parent=0 // loop_footer_branch
    %8 = sbr.rel target = $region3
  $region8: #{forward.3} parent=0 // loop_exit
    _

</llo_original>
